<compile_context>
chip_gen: v6e
topology: v6e:2x2x1
jax: 0.10.0
libtpu: 0.0.40
codegen_flags: <defaults>
</compile_context>

<pallas_src>
import jax
import jax.numpy as jnp
from jax.experimental import pallas as pl
from jax.experimental.pallas import tpu as pltpu

LANE = 128


def _round_up(n, m):
    return ((n + m - 1) // m) * m


def mlp_kernel(xT_ref, p1_ref, p2_ref, p3_ref, o_ref):
    """xT_ref: (input_dim, B_tile), batch on lanes.
    p*_ref : (fan_in + 1, fan_out)  -- rows 0..fan_in-1 = W, last row = bias.
    o_ref  : (output_dim, B_tile).
    """

    def layer(hT, p_ref, relu):
        p = p_ref[...]                              # tiny packed (W; b) tile
        fan_in = p.shape[0] - 1
        fan_out = p.shape[1]
        rows = []
        for j in range(fan_out):                    # fully unrolled: 4 + 2 + 1 units
            w_col = p[:fan_in, j:j + 1]             # (fan_in, 1) -> lane-broadcast
            b_j = p[fan_in:, j:j + 1]               # (1, 1)
            # VPU multiply + XLU sublane reduce; no MXU involvement.
            r = jnp.sum(hT * w_col, axis=0, keepdims=True) + b_j   # (1, B_tile)
            rows.append(r)
        out = rows[0] if fan_out == 1 else jnp.concatenate(rows, axis=0)
        return jnp.maximum(out, 0.0) if relu else out

    h = layer(xT_ref[...], p1_ref, relu=True)       # (4, B_tile)
    h = layer(h, p2_ref, relu=True)                 # (2, B_tile)
    o_ref[...] = layer(h, p3_ref, relu=False).astype(o_ref.dtype)


def mlp_forward(x, p1, p2, p3):
    batch, d_in = x.shape
    d_out = p3.shape[1]

    # Batch on lanes, padded to a multiple of 128 so loads/stores are unmasked
    # and lane-dense. Zero-padding is safe through ReLU; padded columns are
    # sliced off at the end.
    tile_b = min(512, _round_up(max(batch, 1), LANE))   # 512x8 f32 tile is tiny even on v7x's 64 MiB VMEM
    bp = _round_up(batch, tile_b)
    xT = jnp.pad(x.T, ((0, 0), (0, bp - batch)))        # (d_in, bp)

    # Advisory cost hint so XLA does not treat this ~1 KB custom call as expensive.
    cost = pl.CostEstimate(
        flops=2 * 42 * bp,                              # (8*4 + 4*2 + 2*1) MACs per row
        transcendentals=0,
        bytes_accessed=4 * (xT.size + d_out * bp + p1.size + p2.size + p3.size),
    )

    def full_param(p):
        return pl.BlockSpec(p.shape, lambda i: (0, 0))  # whole-array block, resident across grid

    out_T = pl.pallas_call(
        mlp_kernel,
        out_shape=jax.ShapeDtypeStruct((d_out, bp), jnp.float32),
        grid=(bp // tile_b,),
        in_specs=[
            pl.BlockSpec((d_in, tile_b), lambda i: (0, i)),
            full_param(p1), full_param(p2), full_param(p3),
        ],
        out_specs=pl.BlockSpec((d_out, tile_b), lambda i: (0, i)),
        compiler_params=pltpu.CompilerParams(
            dimension_semantics=("parallel",)),         # batch tiles pipeline / shard across TCs
        cost_estimate=cost,
    )(xT, p1, p2, p3)

    # If this MLP is embedded in a larger model, cache/prefetch the packed
    # params across calls instead of re-passing them every invocation.
    return out_T[:, :batch].T                            # (batch, d_out)


def init_params(key, input_dim=8, output_dim=1):
    # Deterministic init mimicking PyTorch Linear default (uniform +-1/sqrt(fan_in)),
    # packed per layer as (fan_in + 1, fan_out) with the bias as the last row.
    ks = jax.random.split(key, 6)

    def packed_linear(kw, kb, fan_in, fan_out):
        bound = 1.0 / jnp.sqrt(jnp.float32(fan_in))
        w = jax.random.uniform(kw, (fan_in, fan_out), jnp.float32, -bound, bound)
        b = jax.random.uniform(kb, (1, fan_out), jnp.float32, -bound, bound)
        return jnp.concatenate([w, b], axis=0)

    p1 = packed_linear(ks[0], ks[1], input_dim, 4)
    p2 = packed_linear(ks[2], ks[3], 4, 2)
    p3 = packed_linear(ks[4], ks[5], 2, output_dim)
    return p1, p2, p3


def ref_forward(x, p1, p2, p3):
    def lin(h, p):
        return h @ p[:-1] + p[-1:]
    h = jnp.maximum(lin(x, p1), 0.0)
    h = jnp.maximum(lin(h, p2), 0.0)
    return lin(h, p3)


if __name__ == "__main__":
    key = jax.random.PRNGKey(0)
    k_x, k_p = jax.random.split(key)

    batch, input_dim, output_dim = 16, 8, 1
    x = jax.random.normal(k_x, (batch, input_dim), jnp.float32)
    p1, p2, p3 = init_params(k_p, input_dim, output_dim)

    out = mlp_forward(x, p1, p2, p3)
    jax.block_until_ready(out)

    ref = ref_forward(x, p1, p2, p3)
    assert out.shape == (batch, output_dim)
    assert jnp.allclose(out, ref, atol=1e-5), "mismatch vs reference"

    print("KERNEL_OK")
</pallas_src>

<mosaic_0001>
module attributes {stable_mosaic.version = 11 : i64} {
  func.func @mlp_kernel(%arg0: i32, %arg1: memref<8x128xf32, #tpu.memory_space<vmem>>, %arg2: memref<9x4xf32, #tpu.memory_space<vmem>>, %arg3: memref<5x2xf32, #tpu.memory_space<vmem>>, %arg4: memref<3x1xf32, #tpu.memory_space<vmem>>, %arg5: memref<1x128xf32, #tpu.memory_space<vmem>>) attributes {dimension_semantics = [#tpu.dimension_semantics<parallel>], iteration_bounds = array<i64: 1>, scalar_prefetch = 0 : i64, scratch_operands = 0 : i64, tpu.core_type = #tpu.core_type<tc>, window_params = [{transform_indices = @transform_0, window_bounds = array<i64: 8, 128>}, {pipeline_mode = #tpu.pipeline_mode<synchronous>, transform_indices = @transform_1, window_bounds = array<i64: 9, 4>}, {pipeline_mode = #tpu.pipeline_mode<synchronous>, transform_indices = @transform_2, window_bounds = array<i64: 5, 2>}, {pipeline_mode = #tpu.pipeline_mode<synchronous>, transform_indices = @transform_3, window_bounds = array<i64: 3, 1>}, {transform_indices = @transform_4, window_bounds = array<i64: 1, 128>}]} {
    %c0 = arith.constant 0 : index
    %c0_0 = arith.constant 0 : index
    %0 = vector.load %arg1[%c0, %c0_0] : memref<8x128xf32, #tpu.memory_space<vmem>>, vector<8x128xf32>
    %c0_1 = arith.constant 0 : index
    %c0_2 = arith.constant 0 : index
    %1 = vector.load %arg2[%c0_1, %c0_2] : memref<9x4xf32, #tpu.memory_space<vmem>>, vector<9x4xf32>
    %2 = vector.extract_strided_slice %1 {offsets = [0, 0], sizes = [8, 1], strides = [1, 1]} : vector<9x4xf32> to vector<8x1xf32>
    %3 = vector.extract_strided_slice %1 {offsets = [8, 0], sizes = [1, 1], strides = [1, 1]} : vector<9x4xf32> to vector<1x1xf32>
    %4 = vector.broadcast %2 : vector<8x1xf32> to vector<8x128xf32>
    %5 = arith.mulf %0, %4 : vector<8x128xf32>
    %cst = arith.constant dense<0.000000e+00> : vector<128xf32>
    %6 = vector.multi_reduction <add>, %5, %cst [0] : vector<8x128xf32> to vector<128xf32>
    %7 = vector.shape_cast %6 : vector<128xf32> to vector<1x128xf32>
    %8 = vector.broadcast %3 : vector<1x1xf32> to vector<1x128xf32>
    %9 = arith.addf %7, %8 : vector<1x128xf32>
    %10 = vector.extract_strided_slice %1 {offsets = [0, 1], sizes = [8, 1], strides = [1, 1]} : vector<9x4xf32> to vector<8x1xf32>
    %11 = vector.extract_strided_slice %1 {offsets = [8, 1], sizes = [1, 1], strides = [1, 1]} : vector<9x4xf32> to vector<1x1xf32>
    %12 = vector.broadcast %10 : vector<8x1xf32> to vector<8x128xf32>
    %13 = arith.mulf %0, %12 : vector<8x128xf32>
    %cst_3 = arith.constant dense<0.000000e+00> : vector<128xf32>
    %14 = vector.multi_reduction <add>, %13, %cst_3 [0] : vector<8x128xf32> to vector<128xf32>
    %15 = vector.shape_cast %14 : vector<128xf32> to vector<1x128xf32>
    %16 = vector.broadcast %11 : vector<1x1xf32> to vector<1x128xf32>
    %17 = arith.addf %15, %16 : vector<1x128xf32>
    %18 = vector.extract_strided_slice %1 {offsets = [0, 2], sizes = [8, 1], strides = [1, 1]} : vector<9x4xf32> to vector<8x1xf32>
    %19 = vector.extract_strided_slice %1 {offsets = [8, 2], sizes = [1, 1], strides = [1, 1]} : vector<9x4xf32> to vector<1x1xf32>
    %20 = vector.broadcast %18 : vector<8x1xf32> to vector<8x128xf32>
    %21 = arith.mulf %0, %20 : vector<8x128xf32>
    %cst_4 = arith.constant dense<0.000000e+00> : vector<128xf32>
    %22 = vector.multi_reduction <add>, %21, %cst_4 [0] : vector<8x128xf32> to vector<128xf32>
    %23 = vector.shape_cast %22 : vector<128xf32> to vector<1x128xf32>
    %24 = vector.broadcast %19 : vector<1x1xf32> to vector<1x128xf32>
    %25 = arith.addf %23, %24 : vector<1x128xf32>
    %26 = vector.extract_strided_slice %1 {offsets = [0, 3], sizes = [8, 1], strides = [1, 1]} : vector<9x4xf32> to vector<8x1xf32>
    %27 = vector.extract_strided_slice %1 {offsets = [8, 3], sizes = [1, 1], strides = [1, 1]} : vector<9x4xf32> to vector<1x1xf32>
    %28 = vector.broadcast %26 : vector<8x1xf32> to vector<8x128xf32>
    %29 = arith.mulf %0, %28 : vector<8x128xf32>
    %cst_5 = arith.constant dense<0.000000e+00> : vector<128xf32>
    %30 = vector.multi_reduction <add>, %29, %cst_5 [0] : vector<8x128xf32> to vector<128xf32>
    %31 = vector.shape_cast %30 : vector<128xf32> to vector<1x128xf32>
    %32 = vector.broadcast %27 : vector<1x1xf32> to vector<1x128xf32>
    %33 = arith.addf %31, %32 : vector<1x128xf32>
    %34 = tpu.concatenate %9, %17, %25, %33 in 0 : vector<1x128xf32>, vector<1x128xf32>, vector<1x128xf32>, vector<1x128xf32> -> vector<4x128xf32>
    %cst_6 = arith.constant 0.000000e+00 : f32
    %35 = vector.broadcast %cst_6 : f32 to vector<4x128xf32>
    %36 = arith.maximumf %34, %35 : vector<4x128xf32>
    %c0_7 = arith.constant 0 : index
    %c0_8 = arith.constant 0 : index
    %37 = vector.load %arg3[%c0_7, %c0_8] : memref<5x2xf32, #tpu.memory_space<vmem>>, vector<5x2xf32>
    %38 = vector.extract_strided_slice %37 {offsets = [0, 0], sizes = [4, 1], strides = [1, 1]} : vector<5x2xf32> to vector<4x1xf32>
    %39 = vector.extract_strided_slice %37 {offsets = [4, 0], sizes = [1, 1], strides = [1, 1]} : vector<5x2xf32> to vector<1x1xf32>
    %40 = vector.broadcast %38 : vector<4x1xf32> to vector<4x128xf32>
    %41 = arith.mulf %36, %40 : vector<4x128xf32>
    %cst_9 = arith.constant dense<0.000000e+00> : vector<128xf32>
    %42 = vector.multi_reduction <add>, %41, %cst_9 [0] : vector<4x128xf32> to vector<128xf32>
    %43 = vector.shape_cast %42 : vector<128xf32> to vector<1x128xf32>
    %44 = vector.broadcast %39 : vector<1x1xf32> to vector<1x128xf32>
    %45 = arith.addf %43, %44 : vector<1x128xf32>
    %46 = vector.extract_strided_slice %37 {offsets = [0, 1], sizes = [4, 1], strides = [1, 1]} : vector<5x2xf32> to vector<4x1xf32>
    %47 = vector.extract_strided_slice %37 {offsets = [4, 1], sizes = [1, 1], strides = [1, 1]} : vector<5x2xf32> to vector<1x1xf32>
    %48 = vector.broadcast %46 : vector<4x1xf32> to vector<4x128xf32>
    %49 = arith.mulf %36, %48 : vector<4x128xf32>
    %cst_10 = arith.constant dense<0.000000e+00> : vector<128xf32>
    %50 = vector.multi_reduction <add>, %49, %cst_10 [0] : vector<4x128xf32> to vector<128xf32>
    %51 = vector.shape_cast %50 : vector<128xf32> to vector<1x128xf32>
    %52 = vector.broadcast %47 : vector<1x1xf32> to vector<1x128xf32>
    %53 = arith.addf %51, %52 : vector<1x128xf32>
    %54 = tpu.concatenate %45, %53 in 0 : vector<1x128xf32>, vector<1x128xf32> -> vector<2x128xf32>
    %cst_11 = arith.constant 0.000000e+00 : f32
    %55 = vector.broadcast %cst_11 : f32 to vector<2x128xf32>
    %56 = arith.maximumf %54, %55 : vector<2x128xf32>
    %c0_12 = arith.constant 0 : index
    %c0_13 = arith.constant 0 : index
    %57 = vector.load %arg4[%c0_12, %c0_13] : memref<3x1xf32, #tpu.memory_space<vmem>>, vector<3x1xf32>
    %58 = vector.extract_strided_slice %57 {offsets = [0, 0], sizes = [2, 1], strides = [1, 1]} : vector<3x1xf32> to vector<2x1xf32>
    %59 = vector.extract_strided_slice %57 {offsets = [2, 0], sizes = [1, 1], strides = [1, 1]} : vector<3x1xf32> to vector<1x1xf32>
    %60 = vector.broadcast %58 : vector<2x1xf32> to vector<2x128xf32>
    %61 = arith.mulf %56, %60 : vector<2x128xf32>
    %cst_14 = arith.constant dense<0.000000e+00> : vector<128xf32>
    %62 = vector.multi_reduction <add>, %61, %cst_14 [0] : vector<2x128xf32> to vector<128xf32>
    %63 = vector.shape_cast %62 : vector<128xf32> to vector<1x128xf32>
    %64 = vector.broadcast %59 : vector<1x1xf32> to vector<1x128xf32>
    %65 = arith.addf %63, %64 : vector<1x128xf32>
    %c0_15 = arith.constant 0 : index
    %c0_16 = arith.constant 0 : index
    %66 = vector.load %arg5[%c0_15, %c0_16] : memref<1x128xf32, #tpu.memory_space<vmem>>, vector<1x128xf32>
    tpu.vector_store %arg5[%c0_15, %c0_16], %65 {strides = array<i32>} : memref<1x128xf32, #tpu.memory_space<vmem>>, vector<1x128xf32>,
    return
  }
  func.func @transform_0(%arg0: i32) -> (i32, i32) {
    %c0_i32 = arith.constant 0 : i32
    %c0_i32_0 = arith.constant 0 : i32
    return %c0_i32, %arg0 : i32, i32
  }
  func.func @transform_1(%arg0: i32) -> (i32, i32) {
    %c0_i32 = arith.constant 0 : i32
    %c0_i32_0 = arith.constant 0 : i32
    %c0_i32_1 = arith.constant 0 : i32
    return %c0_i32, %c0_i32_0 : i32, i32
  }
  func.func @transform_2(%arg0: i32) -> (i32, i32) {
    %c0_i32 = arith.constant 0 : i32
    %c0_i32_0 = arith.constant 0 : i32
    %c0_i32_1 = arith.constant 0 : i32
    return %c0_i32, %c0_i32_0 : i32, i32
  }
  func.func @transform_3(%arg0: i32) -> (i32, i32) {
    %c0_i32 = arith.constant 0 : i32
    %c0_i32_0 = arith.constant 0 : i32
    %c0_i32_1 = arith.constant 0 : i32
    return %c0_i32, %c0_i32_0 : i32, i32
  }
  func.func @transform_4(%arg0: i32) -> (i32, i32) {
    %c0_i32 = arith.constant 0 : i32
    %c0_i32_0 = arith.constant 0 : i32
    return %c0_i32, %arg0 : i32, i32
  }
}

</mosaic_0001>

<llo_original>
// kernel: tpu_custom_call.1
$region0: #{tpu_custom_call.1}
  #allocation0 [shape = 'u32[]', space=smem, size = 0x4, offset = 0x4, fixed_abs, tag = 'smem constant byte address 0x4 - core index']
  #allocation1 [shape = 'u32[144,128]{1,0:T(1,128)}', space=vmem, size = 0x12000, scoped, tag = 'internal scratch']
  %s0 = inlined_call_operand.vmem [shape: f32[8,128], index: 0, kind: input, shape index: {}]
  %s1 = inlined_call_operand.vmem [shape: f32[9,4], index: 1, kind: input, shape index: {}]
  %s2 = inlined_call_operand.vmem [shape: f32[5,2], index: 2, kind: input, shape index: {}]
  %s3 = inlined_call_operand.vmem [shape: f32[3,1], index: 3, kind: input, shape index: {}]
  %s4 = inlined_call_operand.hbm [shape: f32[1,128], index: 4, kind: output, shape index: {}]
  %s5 = sld [smem:[#allocation0]]
  $region26: #{tpu_custom_call.1} parent=0
    _
  %s7 = ssub.s32 1, %s5
  %s8 = scalar_select 0, %s7, %s5
  $region1: #{tpu_custom_call.1} parent=0
    #allocation2 [shape = 'u8[512]{0}', space=vmem, size = 0x400, scoped, tag = 'output window, operand 0, single buffered']
    #allocation3 [shape = 's32[1]{0}', space=sflag, size = 0x4, scoped, tag = 'scoped memory for tpu_custom_call.1']
    %9 = vsyncpa [#allocation3], 0
    // Predicated region
    $region2: #{tpu_custom_call.1} parent=1 // pred_check
      _
    $region3: #{tpu_custom_call.1} parent=1 // pred_check_branch
      %11 = sbr.rel (0) target = $region5
    $region4: #{tpu_custom_call.1} parent=1 // pred_region
      _
    $region5: #{tpu_custom_call.1} parent=1 // pred_fallthru
      _
    // Predicated region
    $region6: #{tpu_custom_call.1} parent=1 // pred_check
      _
    $region7: #{tpu_custom_call.1} parent=1 // pred_check_branch
      %13 = sbr.rel (0) target = $region9
    $region8: #{tpu_custom_call.1} parent=1 // pred_region
      _
    $region9: #{tpu_custom_call.1} parent=1 // pred_fallthru
      _
    // Predicated region
    $region10: #{tpu_custom_call.1} parent=1 // pred_check
      _
    $region11: #{tpu_custom_call.1} parent=1 // pred_check_branch
      %15 = sbr.rel (0) target = $region13
    $region12: #{tpu_custom_call.1} parent=1 // pred_region
      _
    $region13: #{tpu_custom_call.1} parent=1 // pred_fallthru
      _
    // Predicated region
    $region14: #{tpu_custom_call.1} parent=1 // pred_check
      _
    $region15: #{tpu_custom_call.1} parent=1 // pred_check_branch
      %17 = sbr.rel (0) target = $region17
    $region16: #{tpu_custom_call.1} parent=1 // pred_region
      _
    $region17: #{tpu_custom_call.1} parent=1 // pred_fallthru
      _
    %v18 = vld [vmem:[%s0] sm:$0xff]
    %v19 = vld [vmem:[%s1] sm:$0xff]
    %v20 = vld [vmem:[%s1 + $0x8] sm:$0x1]
    %22 = vset.pattern.permute.xlu0 0
    %23 = vperm.xlu0 %22, %v19
    %v24 = vpop.permute.xlu0 %23
    %v26 = vmul.f32 %v18, %v24
    %v27 = vrot.slane %v26, 4
    %v28 = vadd.f32 %v26, %v27
    %v29 = vrot.slane %v28, 2
    %v30 = vadd.f32 %v28, %v29
    %v31 = vrot.slane %v30, 1
    %v32 = vadd.f32 %v30, %v31
    %34 = vset.pattern.permute.xlu0 0
    %35 = vperm.xlu0 %34, %v20
    %v36 = vpop.permute.xlu0 %35
    %v38 = vadd.f32 %v32, %v36
    %39 = vset.pattern.permute.xlu0 1
    %40 = vperm.xlu0 %39, %v19
    %v41 = vpop.permute.xlu0 %40
    %v43 = vmul.f32 %v18, %v41
    %v44 = vrot.slane %v43, 4
    %v45 = vadd.f32 %v43, %v44
    %v46 = vrot.slane %v45, 2
    %v47 = vadd.f32 %v45, %v46
    %v48 = vrot.slane %v47, 1
    %v49 = vadd.f32 %v47, %v48
    %50 = vset.pattern.permute.xlu0 1
    %51 = vperm.xlu0 %50, %v20
    %v52 = vpop.permute.xlu0 %51
    %v54 = vadd.f32 %v49, %v52
    %55 = vset.pattern.permute.xlu0 2
    %56 = vperm.xlu0 %55, %v19
    %v57 = vpop.permute.xlu0 %56
    %v59 = vmul.f32 %v18, %v57
    %v60 = vrot.slane %v59, 4
    %v61 = vadd.f32 %v59, %v60
    %v62 = vrot.slane %v61, 2
    %v63 = vadd.f32 %v61, %v62
    %v64 = vrot.slane %v63, 1
    %v65 = vadd.f32 %v63, %v64
    %66 = vset.pattern.permute.xlu0 2
    %67 = vperm.xlu0 %66, %v20
    %v68 = vpop.permute.xlu0 %67
    %v70 = vadd.f32 %v65, %v68
    %71 = vset.pattern.permute.xlu0 3
    %72 = vperm.xlu0 %71, %v19
    %v73 = vpop.permute.xlu0 %72
    %v75 = vmul.f32 %v18, %v73
    %v76 = vrot.slane %v75, 4
    %v77 = vadd.f32 %v75, %v76
    %v78 = vrot.slane %v77, 2
    %v79 = vadd.f32 %v77, %v78
    %v80 = vrot.slane %v79, 1
    %v81 = vadd.f32 %v79, %v80
    %82 = vset.pattern.permute.xlu0 3
    %83 = vperm.xlu0 %82, %v20
    %v84 = vpop.permute.xlu0 %83
    %v86 = vadd.f32 %v81, %v84
    %v88 = vrot.slane %v54, 7
    %v91 = vrot.slane %v70, 6
    %v94 = vrot.slane %v86, 5
    %vm96 = vcmask 1040384
    %v97 = vsel %vm96, %v38, %v88
    %vm98 = vcmask 1041408
    %v99 = vsel %vm98, %v97, %v91
    %vm100 = vcmask 1042432
    %v101 = vsel %vm100, %v99, %v94
    %v102 = vmax.f32 %v101, 0.0
    %v103 = vld [vmem:[%s2] sm:$0x1f]
    %105 = vset.pattern.permute.xlu0 0
    %106 = vperm.xlu0 %105, %v103
    %v107 = vpop.permute.xlu0 %106
    %v109 = vmul.f32 %v102, %v107
    %vm110 = vcmask 1043456
    %v111 = vsel %vm110, %v109, 0.0
    %v112 = vrot.slane %v111, 4
    %v113 = vadd.f32 %v111, %v112
    %v114 = vrot.slane %v113, 2
    %v115 = vadd.f32 %v113, %v114
    %v116 = vrot.slane %v115, 1
    %v117 = vadd.f32 %v115, %v116
    %v118 = vadd.f32 %v117, %v107
    %119 = vset.pattern.permute.xlu0 1
    %120 = vperm.xlu0 %119, %v103
    %v121 = vpop.permute.xlu0 %120
    %v123 = vmul.f32 %v102, %v121
    %v124 = vsel %vm110, %v123, 0.0
    %v125 = vrot.slane %v124, 4
    %v126 = vadd.f32 %v124, %v125
    %v127 = vrot.slane %v126, 2
    %v128 = vadd.f32 %v126, %v127
    %v129 = vrot.slane %v128, 1
    %v130 = vadd.f32 %v128, %v129
    %v131 = vadd.f32 %v130, %v121
    %v133 = vrot.slane %v118, 4
    %v136 = vrot.slane %v131, 3
    %v138 = vsel %vm96, %v133, %v136
    %v139 = vmax.f32 %v138, 0.0
    %v140 = vld [vmem:[%s3] sm:$0x7]
    %142 = vset.pattern.permute.xlu0 0
    %143 = vperm.xlu0 %142, %v140
    %v144 = vpop.permute.xlu0 %143
    %v146 = vmul.f32 %v139, %v144
    %v147 = vsel %vm98, %v146, 0.0
    %v148 = vrot.slane %v147, 4
    %v149 = vadd.f32 %v147, %v148
    %v150 = vrot.slane %v149, 2
    %v151 = vadd.f32 %v149, %v150
    %v152 = vrot.slane %v151, 1
    %v153 = vadd.f32 %v151, %v152
    %v154 = vadd.f32 %v153, %v144
    %155 = vst [vmem:[#allocation2 - $0x2] sm:$0x4] %v154
    // Predicated region
    $region18: #{tpu_custom_call.1} parent=1 // pred_check
      _
    $region19: #{tpu_custom_call.1} parent=1 // pred_check_branch
      %157 = sbr.rel (0) target = $region21
    $region20: #{tpu_custom_call.1} parent=1 // pred_region
      %s159 = ssub.s32 16, 16
      %160 = vsyncadd [#allocation3], %s159
      %s162 = sshll.u32 [#allocation2], 4
      %s163 = int_to_ptr.vmem [resolvable:$true] %s162
      %165 = dma.vmem_to_hbm [thread:$0]  %s163, 16, %s4, [#allocation3]
    $region21: #{tpu_custom_call.1} parent=1 // pred_fallthru
      _
    // Predicated region
    $region22: #{tpu_custom_call.1} parent=1 // pred_check
      _
    $region23: #{tpu_custom_call.1} parent=1 // pred_check_branch
      %167 = sbr.rel (0) target = $region25
    $region24: #{tpu_custom_call.1} parent=1 // pred_region
      %168 = dma.done [#allocation3], 16
    $region25: #{tpu_custom_call.1} parent=1 // pred_fallthru
      _
    %169 = vsyncpa [#allocation3], 1

</llo_original>
